<compile_context>
chip_gen: v7x
topology: tpu7x:2x2x1
jax: 0.10.0
libtpu: 0.0.40
codegen_flags: <defaults>
</compile_context>

<pallas_src>
import functools

import jax
import jax.numpy as jnp
from jax.experimental import pallas as pl
from jax.experimental.pallas import tpu as pltpu


_HALF_LOG_2PI = 0.9189385332046727


def _round_up(x, m):
    return (x + m - 1) // m * m


# ----------------------------- in-kernel helpers -----------------------------


def _log_factorial(c):
    # lgamma(c + 1) for c >= 0 via a shift-by-4 Stirling series (|err| < 1e-7).
    # 2 logs / element (EUP) instead of an external gammaln pass over HBM.
    z = c + 1.0
    x = z + 4.0
    xi = 1.0 / x
    xi2 = xi * xi
    series = xi * (1.0 / 12.0 - xi2 * (1.0 / 360.0 - xi2 * (1.0 / 1260.0)))
    shift = jnp.log(z * (z + 1.0) * (z + 2.0) * (z + 3.0))
    return (x - 0.5) * jnp.log(x) - x + _HALF_LOG_2PI + series - shift


def _poisson_loglik(rate_ref, labels_ref, counts_ref, n_clusters):
    # loglam[c, r] = rate_t[label[c], r]  (K-way select, no one-hot matmul / input stream)
    lab = labels_ref[...]                                        # (Tc, 1) int32
    c = counts_ref[...]                                          # (Tc, Tr) float32
    loglam = jnp.zeros(c.shape, jnp.float32)
    for k in range(n_clusters):                                  # static unroll (K small)
        loglam = loglam + (lab == k).astype(jnp.float32) * rate_ref[k:k + 1, :]
    # Poisson log-prob: c * log(lam) - lam - lgamma(c + 1)
    return c * loglam - jnp.exp(loglam) - _log_factorial(c)


def _position_logp(w_ref, mb_ref, bl_ref, region_tile, n_bins, n_clusters):
    # logits[r, b, k] = sum_m motif_binned[r, b, m] * w_pos[m, k] + pos_baseline[r, b]
    logits = jnp.dot(mb_ref[...].astype(jnp.float32), w_ref[...],
                     preferred_element_type=jnp.float32)          # (Tr*B, K)
    logits = logits.reshape(region_tile, n_bins, n_clusters) + bl_ref[...][:, :, None]
    m = jnp.max(logits, axis=1, keepdims=True)                    # log-softmax over bins
    lse = m + jnp.log(jnp.sum(jnp.exp(logits - m), axis=1, keepdims=True))
    return logits - lse                                           # (Tr, B, K)


# ----------------------------- kernels ---------------------------------------


def _count_rate_kernel(w_ref, mr_ref, baseline_ref, rate_ref):
    # rate_t[k, r] = baseline[r] + sum_m w_count[m, k] * motif_region[r, m]  (lane-dense in R)
    rate_ref[...] = (jax.lax.dot_general(
        w_ref[...], mr_ref[...], (((0,), (1,)), ((), ())),
        preferred_element_type=jnp.float32) + baseline_ref[...])


def _count_elbo_kernel(rate_ref, labels_ref, counts_ref, psum_ref, *,
                       n_cells, n_regions, cell_tile, region_tile, n_clusters):
    lik = _poisson_loglik(rate_ref, labels_ref, counts_ref, n_clusters)
    if (n_cells % cell_tile) or (n_regions % region_tile):
        # partial last tile: mask out-of-range rows/cols (garbage reads) before reducing
        row = (pl.program_id(0) * cell_tile
               + jax.lax.broadcasted_iota(jnp.int32, (cell_tile, region_tile), 0))
        col = (pl.program_id(1) * region_tile
               + jax.lax.broadcasted_iota(jnp.int32, (cell_tile, region_tile), 1))
        lik = jnp.where((row < n_cells) & (col < n_regions), lik, 0.0)
    psum_ref[...] = jnp.zeros(psum_ref.shape, psum_ref.dtype) + jnp.sum(lik)


def _count_full_kernel(rate_ref, labels_ref, counts_ref, lik_ref, *, n_clusters):
    lik_ref[...] = _poisson_loglik(rate_ref, labels_ref, counts_ref, n_clusters)


def _pos_elbo_kernel(w_ref, mb_ref, bl_ref, hist_ref, psum_ref, *,
                     n_regions, region_tile, n_bins, n_clusters):
    logp = _position_logp(w_ref, mb_ref, bl_ref, region_tile, n_bins, n_clusters)
    # fragment-histogram weighted reduction: sum_f logp[r_f, b_f, k_f]
    contrib = hist_ref[...] * logp
    if n_regions % region_tile:
        reg = (pl.program_id(0) * region_tile
               + jax.lax.broadcasted_iota(jnp.int32, (region_tile, n_bins, n_clusters), 0))
        contrib = jnp.where(reg < n_regions, contrib, 0.0)
    psum_ref[...] = jnp.zeros(psum_ref.shape, psum_ref.dtype) + jnp.sum(contrib)


def _pos_table_kernel(w_ref, mb_ref, bl_ref, table_ref, *, region_tile, n_bins, n_clusters):
    # TODO(synk): lane-dense (Tr, B*K) store needs an in-kernel relayout; kept natural
    #             (Tr, B, K) since this path only runs for full-likelihood export.
    table_ref[...] = _position_logp(w_ref, mb_ref, bl_ref, region_tile, n_bins, n_clusters)


# --------------------------- pallas wrappers ---------------------------------


def count_rate_table(motif_region, w_count, count_baseline_row):
    R = motif_region.shape[0]
    K = w_count.shape[1]
    vmem = pl.BlockSpec(memory_space=pltpu.MemorySpace.VMEM)
    return pl.pallas_call(
        _count_rate_kernel,
        out_shape=jax.ShapeDtypeStruct((K, R), jnp.float32),
        in_specs=[vmem, vmem, vmem],
        out_specs=vmem,
    )(w_count, motif_region, count_baseline_row)


def _count_tiles(C, R, cell_tile, region_tile):
    tc = min(cell_tile, _round_up(C, 8))
    tr = R if R <= region_tile else region_tile
    return tc, tr, pl.cdiv(C, tc), pl.cdiv(R, tr)


def count_loglik_sum(rate_t, labels_col, counts, *, cell_tile=256, region_tile=512):
    """sum over cells/regions of the Poisson log-likelihood (no (C, R) materialization)."""
    C, R = counts.shape
    K = rate_t.shape[0]
    tc, tr, gc, gr = _count_tiles(C, R, cell_tile, region_tile)
    kernel = functools.partial(_count_elbo_kernel, n_cells=C, n_regions=R,
                               cell_tile=tc, region_tile=tr, n_clusters=K)
    partials = pl.pallas_call(
        kernel,
        grid=(gc, gr),
        in_specs=[
            pl.BlockSpec((K, tr), lambda i, j: (0, j)),       # transposed rate table
            pl.BlockSpec((tc, 1), lambda i, j: (i, 0)),       # cluster labels
            pl.BlockSpec((tc, tr), lambda i, j: (i, j)),      # fragment counts
        ],
        out_specs=pl.BlockSpec((1, 1, 8, 128), lambda i, j: (i, j, 0, 0)),
        out_shape=jax.ShapeDtypeStruct((gc, gr, 8, 128), jnp.float32),
        compiler_params=pltpu.CompilerParams(
            dimension_semantics=("parallel", "parallel")),
        cost_estimate=pl.CostEstimate(
            flops=(3 * K + 20) * C * R,
            transcendentals=3 * C * R,
            bytes_accessed=4 * (C * R + C + K * R) + 4096 * gc * gr),
    )(rate_t, labels_col, counts)
    return partials[:, :, 0, 0].sum()


def count_loglik_full(rate_t, labels_col, counts, *, cell_tile=256, region_tile=512):
    C, R = counts.shape
    K = rate_t.shape[0]
    tc, tr, gc, gr = _count_tiles(C, R, cell_tile, region_tile)
    kernel = functools.partial(_count_full_kernel, n_clusters=K)
    return pl.pallas_call(
        kernel,
        grid=(gc, gr),
        in_specs=[
            pl.BlockSpec((K, tr), lambda i, j: (0, j)),
            pl.BlockSpec((tc, 1), lambda i, j: (i, 0)),
            pl.BlockSpec((tc, tr), lambda i, j: (i, j)),
        ],
        out_specs=pl.BlockSpec((tc, tr), lambda i, j: (i, j)),
        out_shape=jax.ShapeDtypeStruct((C, R), jnp.float32),
        compiler_params=pltpu.CompilerParams(
            dimension_semantics=("parallel", "parallel")),
    )(rate_t, labels_col, counts)


def position_loglik_sum(w_pos, mb_flat, pos_baseline, frag_hist, *, region_tile=64):
    R, B = pos_baseline.shape
    M, K = w_pos.shape
    tr = R if R <= region_tile else region_tile     # region_tile is a multiple of 8
    g = pl.cdiv(R, tr)
    kernel = functools.partial(_pos_elbo_kernel, n_regions=R, region_tile=tr,
                               n_bins=B, n_clusters=K)
    partials = pl.pallas_call(
        kernel,
        grid=(g,),
        in_specs=[
            pl.BlockSpec((M, K), lambda i: (0, 0)),           # weights: loop-invariant
            pl.BlockSpec((tr * B, M), lambda i: (i, 0)),      # motif counts (bf16)
            pl.BlockSpec((tr, B), lambda i: (i, 0)),          # positional baseline
            pl.BlockSpec((tr, B, K), lambda i: (i, 0, 0)),    # fragment histogram
        ],
        out_specs=pl.BlockSpec((1, 8, 128), lambda i: (i, 0, 0)),
        out_shape=jax.ShapeDtypeStruct((g, 8, 128), jnp.float32),
        compiler_params=pltpu.CompilerParams(dimension_semantics=("parallel",)),
        cost_estimate=pl.CostEstimate(
            flops=2 * R * B * M * K + 8 * R * B * K,
            transcendentals=R * B * K + R * K,
            bytes_accessed=2 * R * B * M + 4 * (R * B + R * B * K + M * K) + 4096 * g),
    )(w_pos, mb_flat, pos_baseline, frag_hist)
    return partials[:, 0, 0].sum()


def position_logp_table(w_pos, mb_flat, pos_baseline, *, region_tile=64):
    R, B = pos_baseline.shape
    M, K = w_pos.shape
    tr = R if R <= region_tile else region_tile
    g = pl.cdiv(R, tr)
    kernel = functools.partial(_pos_table_kernel, region_tile=tr, n_bins=B, n_clusters=K)
    return pl.pallas_call(
        kernel,
        grid=(g,),
        in_specs=[
            pl.BlockSpec((M, K), lambda i: (0, 0)),
            pl.BlockSpec((tr * B, M), lambda i: (i, 0)),
            pl.BlockSpec((tr, B), lambda i: (i, 0)),
        ],
        out_specs=pl.BlockSpec((tr, B, K), lambda i: (i, 0, 0)),
        out_shape=jax.ShapeDtypeStruct((R, B, K), jnp.float32),
        compiler_params=pltpu.CompilerParams(dimension_semantics=("parallel",)),
    )(w_pos, mb_flat, pos_baseline)


# ------------------------------ forward --------------------------------------


def model_forward(params, data, return_full_likelihood=False):
    motif_binned = data["motif_binned"]                      # (R, B, M)
    labels = data["labels"].astype(jnp.int32)                # (C,)
    counts = data["counts"].astype(jnp.float32)              # (C, R)
    frag_cell = data["frag_cell"]                            # (F,)
    frag_region = data["frag_region"]                        # (F,)
    frag_bin = data["frag_bin"]                              # (F,)
    C, R = counts.shape
    _, B, M = motif_binned.shape
    K = params["w_count"].shape[1]

    # ---- glue (plain JAX) ----
    motif_region = motif_binned.astype(jnp.float32).sum(axis=1)          # (R, M)
    # bf16 halves the dominant (R*B, M) DMA stream; exact for integer motif counts <= 256.
    # TODO(synk): hoist this cast into the data loader so it runs once per dataset.
    mb = motif_binned if motif_binned.dtype == jnp.bfloat16 else motif_binned.astype(jnp.bfloat16)
    mb_flat = mb.reshape(R * B, M)
    labels_col = labels.reshape(C, 1)
    count_baseline_row = params["count_baseline"].reshape(1, R)

    rate_t = count_rate_table(motif_region, params["w_count"], count_baseline_row)  # (K, R)

    if not return_full_likelihood:
        frag_cluster = labels[frag_cell]
        # TODO(synk): XLA scatter-add histogram (Pallas TPU has no efficient scatter);
        #             switch to sort+segment_sum if profiling shows it dominating.
        frag_hist = jnp.zeros((R, B, K), jnp.float32).at[
            frag_region, frag_bin, frag_cluster].add(1.0)
        count_sum = count_loglik_sum(rate_t, labels_col, counts)
        position_sum = position_loglik_sum(params["w_pos"], mb_flat,
                                           params["pos_baseline"], frag_hist)
        elbo = (-position_sum - count_sum) / (data["n_cells"] * data["n_regions"])
        return elbo

    likelihood_count = count_loglik_full(rate_t, labels_col, counts)                # (C, R)
    logp_table = position_logp_table(params["w_pos"], mb_flat, params["pos_baseline"])
    frag_cluster = labels[frag_cell]
    # TODO(synk): per-fragment gather kept as XLA glue (arbitrary gather has no clean
    #             Pallas TPU form); the hot ELBO path never materializes per-fragment values.
    likelihood_position = logp_table[frag_region, frag_bin, frag_cluster]
    local_cellxregion_ix = frag_cell * R + frag_region
    return {
        "likelihood_position": likelihood_position,
        "likelihood_count": likelihood_count,
        "likelihood": likelihood_position
        + likelihood_count.reshape(-1)[local_cellxregion_ix],
    }


# ------------------------------- main ----------------------------------------


if __name__ == "__main__":
    C, R, K, M, B, F = 8, 8, 4, 8, 16, 32   # cells, regions, clusters, motifs, bins, fragments

    key = jax.random.PRNGKey(0)
    ks = jax.random.split(key, 9)
    motif_binned = jax.random.poisson(ks[0], 1.0, (R, B, M)).astype(jnp.float32)
    labels = jax.random.randint(ks[1], (C,), 0, K)
    frag_cell = jax.random.randint(ks[2], (F,), 0, C)
    frag_region = jax.random.randint(ks[3], (F,), 0, R)
    frag_bin = jax.random.randint(ks[4], (F,), 0, B)
    w_count = 0.05 * jax.random.normal(ks[5], (M, K), jnp.float32)
    w_pos = 0.05 * jax.random.normal(ks[6], (M, K), jnp.float32)
    count_baseline = 0.1 * jax.random.normal(ks[7], (R,), jnp.float32)
    pos_baseline = 0.1 * jax.random.normal(ks[8], (R, B), jnp.float32)

    counts = jnp.zeros((C, R), jnp.float32).at[frag_cell, frag_region].add(1.0)

    params = dict(w_count=w_count, w_pos=w_pos,
                  count_baseline=count_baseline, pos_baseline=pos_baseline)
    data = dict(motif_binned=motif_binned, labels=labels, counts=counts,
                frag_cell=frag_cell, frag_region=frag_region, frag_bin=frag_bin,
                n_cells=C, n_regions=R)

    elbo = jax.block_until_ready(model_forward(params, data))
    full = jax.block_until_ready(model_forward(params, data,
                                               return_full_likelihood=True))

    # ---- pure-JAX reference for validation ----
    hi = jax.lax.Precision.HIGHEST
    rk_ref = (jnp.dot(motif_binned.sum(1), w_count, precision=hi)
              + count_baseline[:, None])                                  # (R, K)
    loglam_ref = rk_ref[:, labels].T                                      # (C, R)
    lik_count_ref = (counts * loglam_ref - jnp.exp(loglam_ref)
                     - jax.scipy.special.gammaln(counts + 1.0))
    logits_ref = (jnp.dot(motif_binned.reshape(R * B, M), w_pos, precision=hi)
                  .reshape(R, B, K) + pos_baseline[:, :, None])
    logp_ref = logits_ref - jax.scipy.special.logsumexp(logits_ref, axis=1,
                                                        keepdims=True)
    lik_pos_ref = logp_ref[frag_region, frag_bin, labels[frag_cell]]
    elbo_ref = (-lik_pos_ref.sum() - lik_count_ref.sum()) / (C * R)

    assert abs(float(elbo) - float(elbo_ref)) < 1e-3 * max(1.0, abs(float(elbo_ref))), (
        float(elbo), float(elbo_ref))
    assert jnp.allclose(full["likelihood_count"], lik_count_ref,
                        atol=1e-3, rtol=1e-3), "count log-likelihood mismatch"
    assert jnp.allclose(full["likelihood_position"], lik_pos_ref,
                        atol=1e-3, rtol=1e-3), "position log-likelihood mismatch"
    assert jnp.allclose(full["likelihood"],
                        lik_pos_ref + lik_count_ref.reshape(-1)[frag_cell * R + frag_region],
                        atol=1e-3, rtol=1e-3), "combined likelihood mismatch"

    print("KERNEL_OK")
</pallas_src>

<mosaic_0001>
module attributes {stable_mosaic.version = 11 : i64} {
  func.func @_count_rate_kernel(%arg0: memref<8x4xf32, #tpu.memory_space<vmem>>, %arg1: memref<8x8xf32, #tpu.memory_space<vmem>>, %arg2: memref<1x8xf32, #tpu.memory_space<vmem>>, %arg3: memref<4x8xf32, #tpu.memory_space<vmem>>) attributes {dimension_semantics = [], scalar_prefetch = 0 : i64, scratch_operands = 0 : i64, tpu.core_type = #tpu.core_type<tc>} {
    %c0 = arith.constant 0 : index
    %c0_0 = arith.constant 0 : index
    %0 = vector.load %arg0[%c0, %c0_0] : memref<8x4xf32, #tpu.memory_space<vmem>>, vector<8x4xf32>
    %c0_1 = arith.constant 0 : index
    %c0_2 = arith.constant 0 : index
    %1 = vector.load %arg1[%c0_1, %c0_2] : memref<8x8xf32, #tpu.memory_space<vmem>>, vector<8x8xf32>
    %cst = arith.constant dense<0.000000e+00> : vector<4x8xf32>
    %2 = tpu.matmul %0, %1, %cst {dimension_numbers = #tpu.dot_dimension_numbers<[0], [1], [1], [0], [0, 1, 1, 0], [], []>} : vector<8x4xf32>, vector<8x8xf32>, vector<4x8xf32> -> vector<4x8xf32>
    %c0_3 = arith.constant 0 : index
    %c0_4 = arith.constant 0 : index
    %3 = vector.load %arg2[%c0_3, %c0_4] : memref<1x8xf32, #tpu.memory_space<vmem>>, vector<1x8xf32>
    %4 = vector.broadcast %3 : vector<1x8xf32> to vector<4x8xf32>
    %5 = arith.addf %2, %4 : vector<4x8xf32>
    %c0_5 = arith.constant 0 : index
    %c0_6 = arith.constant 0 : index
    %6 = vector.load %arg3[%c0_5, %c0_6] : memref<4x8xf32, #tpu.memory_space<vmem>>, vector<4x8xf32>
    tpu.vector_store %arg3[%c0_5, %c0_6], %5 {strides = array<i32>} : memref<4x8xf32, #tpu.memory_space<vmem>>, vector<4x8xf32>,
    return
  }
}

</mosaic_0001>

<llo_original>
// kernel: tpu_custom_call.1
$region0: #{tpu_custom_call.1}
  #allocation0 [shape = 'u32[]', space=smem, size = 0x4, offset = 0x4, fixed_abs, tag = 'smem constant byte address 0x4 - core index']
  #allocation1 [shape = 'u32[144,128]{1,0:T(1,128)}', space=vmem, size = 0x12000, scoped, tag = 'internal scratch']
  %s0 = inlined_call_operand.vmem [shape: f32[8,4], index: 0, kind: input, shape index: {}]
  %s1 = inlined_call_operand.vmem [shape: f32[8,8], index: 1, kind: input, shape index: {}]
  %s2 = inlined_call_operand.vmem [shape: f32[1,8], index: 2, kind: input, shape index: {}]
  %s3 = inlined_call_operand.hbm [shape: f32[4,8], index: 3, kind: output, shape index: {}]
  %s4 = sld [smem:[#allocation0]]
  $region22: #{tpu_custom_call.1} parent=0
    _
  %s6 = ssub.s32 1, %s4
  %s7 = scalar_select 0, %s6, %s4
  $region1: #{tpu_custom_call.1} parent=0
    #allocation2 [shape = 'u8[2048]{0}', space=vmem, size = 0x800, scoped, tag = 'output window, operand 0, single buffered']
    #allocation3 [shape = 's32[1]{0}', space=sflag, size = 0x4, scoped, tag = 'scoped memory for tpu_custom_call.1']
    %8 = vsyncpa [#allocation3], 0
    // Predicated region
    $region2: #{tpu_custom_call.1} parent=1 // pred_check
      _
    $region3: #{tpu_custom_call.1} parent=1 // pred_check_branch
      %10 = sbr.rel (0) target = $region5
    $region4: #{tpu_custom_call.1} parent=1 // pred_region
      _
    $region5: #{tpu_custom_call.1} parent=1 // pred_fallthru
      _
    // Predicated region
    $region6: #{tpu_custom_call.1} parent=1 // pred_check
      _
    $region7: #{tpu_custom_call.1} parent=1 // pred_check_branch
      %12 = sbr.rel (0) target = $region9
    $region8: #{tpu_custom_call.1} parent=1 // pred_region
      _
    $region9: #{tpu_custom_call.1} parent=1 // pred_fallthru
      _
    // Predicated region
    $region10: #{tpu_custom_call.1} parent=1 // pred_check
      _
    $region11: #{tpu_custom_call.1} parent=1 // pred_check_branch
      %14 = sbr.rel (0) target = $region13
    $region12: #{tpu_custom_call.1} parent=1 // pred_region
      _
    $region13: #{tpu_custom_call.1} parent=1 // pred_fallthru
      _
    %v15 = vld [vmem:[%s0] sm:$0xff]
    %v16 = vld [vmem:[%s1] sm:$0xff]
    %v17 = vld [vmem:[%s2] sm:$0x1]
    %v19 = vlaneseq
    %v20 = vshrl.u32 %v19, 7
    %v21 = vsub.s32 0, %v20
    %v22 = vrot.slane %v17, %v21
    %24 = vxpose.xlu0.b32.start [1/16] %v15, 128
    %25 = vxpose.xlu0.b32.cont [2/16] 0.0, 128
    %26 = vxpose.xlu0.b32.cont [3/16] 0.0, 128
    %27 = vxpose.xlu0.b32.cont [4/16] 0.0, 128
    %28 = vxpose.xlu0.b32.cont [5/16] 0.0, 128
    %29 = vxpose.xlu0.b32.cont [6/16] 0.0, 128
    %30 = vxpose.xlu0.b32.cont [7/16] 0.0, 128
    %31 = vxpose.xlu0.b32.cont [8/16] 0.0, 128
    %32 = vxpose.xlu0.b32.cont [9/16] 0.0, 128
    %33 = vxpose.xlu0.b32.cont [10/16] 0.0, 128
    %34 = vxpose.xlu0.b32.cont [11/16] 0.0, 128
    %35 = vxpose.xlu0.b32.cont [12/16] 0.0, 128
    %36 = vxpose.xlu0.b32.cont [13/16] 0.0, 128
    %37 = vxpose.xlu0.b32.cont [14/16] 0.0, 128
    %38 = vxpose.xlu0.b32.cont [15/16] 0.0, 128
    %39 = vxpose.xlu0.b32.end [16/16] 0.0, 128
    %v40 = vpop.trf.xlu0
    %v41 = vpop.trf.xlu0
    %v42 = vpop.trf.xlu0
    %v43 = vpop.trf.xlu0
    %v44 = vpop.trf.xlu0
    %v45 = vpop.trf.xlu0
    %v46 = vpop.trf.xlu0
    %v47 = vpop.trf.xlu0
    %v48 = vpop.trf.xlu0
    %v49 = vpop.trf.xlu0
    %v50 = vpop.trf.xlu0
    %v51 = vpop.trf.xlu0
    %v52 = vpop.trf.xlu0
    %v53 = vpop.trf.xlu0
    %v54 = vpop.trf.xlu0
    %v55 = vpop.trf.xlu0
    %vm56 = vcmask 64512
    %v58 = vsel %vm56, %v40, 0
    %v61 = vsel %vm56, %v16, 0
    %63 = vmatprep.subr.mxu0 0.0
    %64 = vmatpush1.xpose.msra.mxu0 %v61
    %65 = vmatprep.subr.mxu0 0.0
    %66 = vmatpush1.xpose.msra.mxu0 0.0
    %67 = vmatprep.subr.mxu0 0.0
    %68 = vmatpush1.xpose.msra.mxu0 0.0
    %69 = vmatprep.subr.mxu0 0.0
    %70 = vmatpush1.xpose.msra.mxu0 0.0
    %71 = vmatprep.subr.mxu0 0.0
    %72 = vmatpush1.xpose.msra.mxu0 0.0
    %73 = vmatprep.subr.mxu0 0.0
    %74 = vmatpush1.xpose.msra.mxu0 0.0
    %75 = vmatprep.subr.mxu0 0.0
    %76 = vmatpush1.xpose.msra.mxu0 0.0
    %77 = vmatprep.subr.mxu0 0.0
    %78 = vmatpush1.xpose.msra.mxu0 0.0
    %79 = vmatprep.subr.mxu0 0.0
    %80 = vmatpush1.xpose.msra.mxu0 0.0
    %81 = vmatprep.subr.mxu0 0.0
    %82 = vmatpush1.xpose.msra.mxu0 0.0
    %83 = vmatprep.subr.mxu0 0.0
    %84 = vmatpush1.xpose.msra.mxu0 0.0
    %85 = vmatprep.subr.mxu0 0.0
    %86 = vmatpush1.xpose.msra.mxu0 0.0
    %87 = vmatprep.subr.mxu0 0.0
    %88 = vmatpush1.xpose.msra.mxu0 0.0
    %89 = vmatprep.subr.mxu0 0.0
    %90 = vmatpush1.xpose.msra.mxu0 0.0
    %91 = vmatprep.subr.mxu0 0.0
    %92 = vmatpush1.xpose.msra.mxu0 0.0
    %93 = vmatprep.subr.mxu0 0.0
    %94 = vmatpush1.xpose.msra.mxu0 0.0
    %95 = vmatprep.subr.mxu0 0.0
    %96 = vmatpush1.xpose.msra.mxu0 0.0
    %97 = vmatprep.subr.mxu0 0.0
    %98 = vmatpush1.xpose.msra.mxu0 0.0
    %99 = vmatprep.subr.mxu0 0.0
    %100 = vmatpush1.xpose.msra.mxu0 0.0
    %101 = vmatprep.subr.mxu0 0.0
    %102 = vmatpush1.xpose.msra.mxu0 0.0
    %103 = vmatprep.subr.mxu0 0.0
    %104 = vmatpush1.xpose.msra.mxu0 0.0
    %105 = vmatprep.subr.mxu0 0.0
    %106 = vmatpush1.xpose.msra.mxu0 0.0
    %107 = vmatprep.subr.mxu0 0.0
    %108 = vmatpush1.xpose.msra.mxu0 0.0
    %109 = vmatprep.subr.mxu0 0.0
    %110 = vmatpush1.xpose.msra.mxu0 0.0
    %111 = vmatprep.subr.mxu0 0.0
    %112 = vmatpush1.xpose.msra.mxu0 0.0
    %113 = vmatprep.subr.mxu0 0.0
    %114 = vmatpush1.xpose.msra.mxu0 0.0
    %115 = vmatprep.subr.mxu0 0.0
    %116 = vmatpush1.xpose.msra.mxu0 0.0
    %117 = vmatprep.subr.mxu0 0.0
    %118 = vmatpush1.xpose.msra.mxu0 0.0
    %119 = vmatprep.subr.mxu0 0.0
    %120 = vmatpush1.xpose.msra.mxu0 0.0
    %121 = vmatprep.subr.mxu0 0.0
    %122 = vmatpush1.xpose.msra.mxu0 0.0
    %123 = vmatprep.subr.mxu0 0.0
    %124 = vmatpush1.xpose.msra.mxu0 0.0
    %125 = vmatprep.subr.mxu0 0.0
    %126 = vmatpush1.xpose.msra.mxu0 0.0
    %127 = vmatprep.mubr.f32.mxu0 0.0
    %128 = vmatmul.mubr.f32.gmra.mrb[0].mxu0 %v58
    %v129 = vpop.f32.mrb[0].mxu0
    %v130 = vadd.f32 %v22, %v129
    %v131 = vpop.f32.mrb[0].mxu0
    %132 = vdwg.mxu0
    %vm133 = vcmask 60416
    %134 = vst.msk [vmem:[#allocation2] sm:$0xf] %vm133, %v130
    // Predicated region
    $region14: #{tpu_custom_call.1} parent=1 // pred_check
      _
    $region15: #{tpu_custom_call.1} parent=1 // pred_check_branch
      %136 = sbr.rel (0) target = $region17
    $region16: #{tpu_custom_call.1} parent=1 // pred_region
      %s138 = ssub.s32 64, 64
      %139 = vsyncadd [#allocation3], %s138
      %s141 = sshll.u32 [#allocation2], 4
      %s142 = int_to_ptr.vmem [resolvable:$true] %s141
      %144 = dma.vmem_to_hbm [thread:$0]  %s142, 64, %s3, [#allocation3]
    $region17: #{tpu_custom_call.1} parent=1 // pred_fallthru
      _
    // Predicated region
    $region18: #{tpu_custom_call.1} parent=1 // pred_check
      _
    $region19: #{tpu_custom_call.1} parent=1 // pred_check_branch
      %146 = sbr.rel (0) target = $region21
    $region20: #{tpu_custom_call.1} parent=1 // pred_region
      %147 = dma.done [#allocation3], 64
    $region21: #{tpu_custom_call.1} parent=1 // pred_fallthru
      _
    %148 = vsyncpa [#allocation3], 1

</llo_original>
